<compile_context>
chip_gen: v6e
topology: v6e:2x2x1
jax: 0.10.0
libtpu: 0.0.40
codegen_flags: <defaults>
</compile_context>

<pallas_src>
import jax
import jax.numpy as jnp
from jax.experimental import pallas as pl
from jax.experimental.pallas import tpu as pltpu

LANE = 128      # TPU lane width (hidden dim is padded to this)
TB_MAX = 8192   # max batch-tile rows; double-buffered tiles stay ~3 MiB


def _round_up(n, m):
    return ((n + m - 1) // m) * m


def _cdiv(a, b):
    return (a + b - 1) // b


# --------------------------------------------------------------------------- #
# Kernel
# --------------------------------------------------------------------------- #
def dqn_kernel(x_ref, w1_ref, b1_ref, w2_ref, b2_ref, w3_ref, b3_ref, o_ref):
    # x_ref : (TB, S)   f32   (S = 29, full-array-width last dim)
    # w1    : (S, Hp)   bf16  (Hp = 128)
    # w2    : (Hp, Hp)  bf16
    # w3    : (Hp, A)   bf16  (A = 14, full-array-width last dim)
    # b1,b2 : (1, Hp)   f32 ;  b3 : (1, A) f32
    # o_ref : (TB, A)   f32
    x = x_ref[...].astype(jnp.bfloat16)

    h1 = jnp.dot(x, w1_ref[...], preferred_element_type=jnp.float32) + b1_ref[...]
    h1 = jnp.maximum(h1, 0.0).astype(jnp.bfloat16)

    h2 = jnp.dot(h1, w2_ref[...], preferred_element_type=jnp.float32) + b2_ref[...]
    h2 = jnp.maximum(h2, 0.0).astype(jnp.bfloat16)

    out = jnp.dot(h2, w3_ref[...], preferred_element_type=jnp.float32) + b3_ref[...]
    o_ref[...] = out.astype(o_ref.dtype)


# --------------------------------------------------------------------------- #
# One-time parameter preparation (pad hidden dim to 128 lanes, cast weights
# to bf16).  Call once and reuse; keeps per-step wrapper HBM traffic at zero.
# --------------------------------------------------------------------------- #
def prepare_params(params):
    w1 = params["w1"].astype(jnp.bfloat16)   # (S, H)
    w2 = params["w2"].astype(jnp.bfloat16)   # (H, H)
    w3 = params["w3"].astype(jnp.bfloat16)   # (H, A)
    H = w1.shape[1]
    Hp = _round_up(H, LANE)
    dH = Hp - H
    return dict(
        w1=jnp.pad(w1, ((0, 0), (0, dH))),                         # (S, Hp) bf16
        w2=jnp.pad(w2, ((0, dH), (0, dH))),                        # (Hp, Hp) bf16
        w3=jnp.pad(w3, ((0, dH), (0, 0))),                         # (Hp, A) bf16
        b1=jnp.pad(params["b1"].astype(jnp.float32), ((0, 0), (0, dH))),
        b2=jnp.pad(params["b2"].astype(jnp.float32), ((0, 0), (0, dH))),
        b3=params["b3"].astype(jnp.float32),                       # (1, A) f32
    )


def _choose_tb(batch):
    """Batch tile: multiple of 16 (bf16 sublane packing), <= TB_MAX, and >= 2
    grid steps for non-tiny batches so v7x megacore shards the grid; padding
    waste is kept below one tile."""
    b = _round_up(batch, 16)
    if b <= 32:                 # tiny batch: single step, overhead-bound anyway
        return b
    n_tiles = max(2, _cdiv(b, TB_MAX))
    return _round_up(_cdiv(b, n_tiles), 16)


# --------------------------------------------------------------------------- #
# Forward pass
# --------------------------------------------------------------------------- #
@jax.jit
def dqn_forward(x, padded):
    """x: (B, state_size) float32.  padded: output of prepare_params."""
    B, S = x.shape
    A = padded["w3"].shape[1]

    TB = _choose_tb(B)
    n_blocks = _cdiv(B, TB)
    B_pad = n_blocks * TB
    xp = jnp.pad(x.astype(jnp.float32), ((0, B_pad - B), (0, 0)))

    def resident(a):
        # Weights/biases: same block every grid step -> stay VMEM-resident.
        return pl.BlockSpec(a.shape, lambda i: (0,) * a.ndim)

    out = pl.pallas_call(
        dqn_kernel,
        out_shape=jax.ShapeDtypeStruct((B_pad, A), jnp.float32),
        grid_spec=pltpu.PrefetchScalarGridSpec(
            num_scalar_prefetch=0,
            grid=(n_blocks,),
            in_specs=[
                pl.BlockSpec((TB, S), lambda i: (i, 0)),   # x tile (pipelined)
                resident(padded["w1"]), resident(padded["b1"]),
                resident(padded["w2"]), resident(padded["b2"]),
                resident(padded["w3"]), resident(padded["b3"]),
            ],
            out_specs=pl.BlockSpec((TB, A), lambda i: (i, 0)),
        ),
        compiler_params=pltpu.CompilerParams(
            dimension_semantics=("parallel",),             # both TCs on v7x
        ),
    )(xp, padded["w1"], padded["b1"], padded["w2"], padded["b2"],
      padded["w3"], padded["b3"])

    return out[:B]


# --------------------------------------------------------------------------- #
# Deterministic synthetic init + references
# --------------------------------------------------------------------------- #
def init_params(key, state_size=29, action_size=14, hidden_size=64):
    """PyTorch-style uniform(-1/sqrt(fan_in), +1/sqrt(fan_in)) init."""
    def linear(k, fan_in, fan_out):
        kw, kb = jax.random.split(k)
        bound = 1.0 / jnp.sqrt(fan_in)
        w = jax.random.uniform(kw, (fan_in, fan_out), jnp.float32, -bound, bound)
        b = jax.random.uniform(kb, (1, fan_out), jnp.float32, -bound, bound)
        return w, b

    k1, k2, k3 = jax.random.split(key, 3)
    w1, b1 = linear(k1, state_size, hidden_size)
    w2, b2 = linear(k2, hidden_size, hidden_size)
    w3, b3 = linear(k3, hidden_size, action_size)
    return dict(w1=w1, b1=b1, w2=w2, b2=b2, w3=w3, b3=b3)


def dqn_reference(x, p):
    """Pure-JAX reference mirroring kernel numerics (bf16 MXU operands,
    f32 accumulation + f32 bias/ReLU epilogue)."""
    xb = x.astype(jnp.bfloat16)
    w1 = p["w1"].astype(jnp.bfloat16)
    w2 = p["w2"].astype(jnp.bfloat16)
    w3 = p["w3"].astype(jnp.bfloat16)
    h1 = jnp.maximum(
        jnp.dot(xb, w1, preferred_element_type=jnp.float32) + p["b1"], 0.0
    ).astype(jnp.bfloat16)
    h2 = jnp.maximum(
        jnp.dot(h1, w2, preferred_element_type=jnp.float32) + p["b2"], 0.0
    ).astype(jnp.bfloat16)
    return jnp.dot(h2, w3, preferred_element_type=jnp.float32) + p["b3"]


def dqn_reference_f32(x, p):
    h1 = jnp.maximum(x @ p["w1"] + p["b1"], 0.0)
    h2 = jnp.maximum(h1 @ p["w2"] + p["b2"], 0.0)
    return h2 @ p["w3"] + p["b3"]


if __name__ == "__main__":
    key = jax.random.PRNGKey(0)
    kx, kx2, kp = jax.random.split(key, 3)

    state_size, action_size, hidden_size = 29, 14, 64
    params = init_params(kp, state_size, action_size, hidden_size)
    padded = prepare_params(params)

    # --- small batch (single grid step) ------------------------------------
    batch = 8
    x = jax.random.normal(kx, (batch, state_size), jnp.float32)
    out = jax.block_until_ready(dqn_forward(x, padded))
    assert out.shape == (batch, action_size), out.shape
    ref = dqn_reference(x, params)
    assert jnp.allclose(out, ref, atol=1e-3, rtol=1e-3), "mismatch vs bf16 reference"
    ref32 = dqn_reference_f32(x, params)
    assert jnp.allclose(out, ref32, atol=5e-2, rtol=5e-2), "mismatch vs f32 reference"

    # --- medium batch (multi-step grid + batch padding path) ----------------
    batch2 = 40
    x2 = jax.random.normal(kx2, (batch2, state_size), jnp.float32)
    out2 = jax.block_until_ready(dqn_forward(x2, padded))
    assert out2.shape == (batch2, action_size), out2.shape
    ref2 = dqn_reference(x2, params)
    assert jnp.allclose(out2, ref2, atol=1e-3, rtol=1e-3), "mismatch (multi-block)"

    print("KERNEL_OK")
</pallas_src>

<mosaic_0001>
module attributes {stable_mosaic.version = 11 : i64} {
  func.func @dqn_kernel(%arg0: i32, %arg1: memref<16x29xf32, #tpu.memory_space<vmem>>, %arg2: memref<29x128xbf16, #tpu.memory_space<vmem>>, %arg3: memref<1x128xf32, #tpu.memory_space<vmem>>, %arg4: memref<128x128xbf16, #tpu.memory_space<vmem>>, %arg5: memref<1x128xf32, #tpu.memory_space<vmem>>, %arg6: memref<128x14xbf16, #tpu.memory_space<vmem>>, %arg7: memref<1x14xf32, #tpu.memory_space<vmem>>, %arg8: memref<16x14xf32, #tpu.memory_space<vmem>>) attributes {dimension_semantics = [#tpu.dimension_semantics<parallel>], iteration_bounds = array<i64: 1>, scalar_prefetch = 0 : i64, scratch_operands = 0 : i64, tpu.core_type = #tpu.core_type<tc>, window_params = [{transform_indices = @transform_0, window_bounds = array<i64: 16, 29>}, {pipeline_mode = #tpu.pipeline_mode<synchronous>, transform_indices = @transform_1, window_bounds = array<i64: 29, 128>}, {pipeline_mode = #tpu.pipeline_mode<synchronous>, transform_indices = @transform_2, window_bounds = array<i64: 1, 128>}, {pipeline_mode = #tpu.pipeline_mode<synchronous>, transform_indices = @transform_3, window_bounds = array<i64: 128, 128>}, {pipeline_mode = #tpu.pipeline_mode<synchronous>, transform_indices = @transform_4, window_bounds = array<i64: 1, 128>}, {pipeline_mode = #tpu.pipeline_mode<synchronous>, transform_indices = @transform_5, window_bounds = array<i64: 128, 14>}, {pipeline_mode = #tpu.pipeline_mode<synchronous>, transform_indices = @transform_6, window_bounds = array<i64: 1, 14>}, {transform_indices = @transform_7, window_bounds = array<i64: 16, 14>}]} {
    %c0 = arith.constant 0 : index
    %c0_0 = arith.constant 0 : index
    %0 = vector.load %arg1[%c0, %c0_0] : memref<16x29xf32, #tpu.memory_space<vmem>>, vector<16x29xf32>
    %1 = arith.truncf %0 : vector<16x29xf32> to vector<16x29xbf16>
    %c0_1 = arith.constant 0 : index
    %c0_2 = arith.constant 0 : index
    %2 = vector.load %arg2[%c0_1, %c0_2] : memref<29x128xbf16, #tpu.memory_space<vmem>>, vector<29x128xbf16>
    %cst = arith.constant dense<0.000000e+00> : vector<16x128xf32>
    %3 = tpu.matmul %1, %2, %cst {dimension_numbers = #tpu.dot_dimension_numbers<[1], [0], [0], [1], [0, 0, 1, 1], [], []>} : vector<16x29xbf16>, vector<29x128xbf16>, vector<16x128xf32> -> vector<16x128xf32>
    %c0_3 = arith.constant 0 : index
    %c0_4 = arith.constant 0 : index
    %4 = vector.load %arg3[%c0_3, %c0_4] : memref<1x128xf32, #tpu.memory_space<vmem>>, vector<1x128xf32>
    %5 = vector.broadcast %4 : vector<1x128xf32> to vector<16x128xf32>
    %6 = arith.addf %3, %5 : vector<16x128xf32>
    %cst_5 = arith.constant 0.000000e+00 : f32
    %7 = vector.broadcast %cst_5 : f32 to vector<16x128xf32>
    %8 = arith.maximumf %6, %7 : vector<16x128xf32>
    %9 = arith.truncf %8 : vector<16x128xf32> to vector<16x128xbf16>
    %c0_6 = arith.constant 0 : index
    %c0_7 = arith.constant 0 : index
    %10 = vector.load %arg4[%c0_6, %c0_7] : memref<128x128xbf16, #tpu.memory_space<vmem>>, vector<128x128xbf16>
    %cst_8 = arith.constant dense<0.000000e+00> : vector<16x128xf32>
    %11 = tpu.matmul %9, %10, %cst_8 {dimension_numbers = #tpu.dot_dimension_numbers<[1], [0], [0], [1], [0, 0, 1, 1], [], []>} : vector<16x128xbf16>, vector<128x128xbf16>, vector<16x128xf32> -> vector<16x128xf32>
    %c0_9 = arith.constant 0 : index
    %c0_10 = arith.constant 0 : index
    %12 = vector.load %arg5[%c0_9, %c0_10] : memref<1x128xf32, #tpu.memory_space<vmem>>, vector<1x128xf32>
    %13 = vector.broadcast %12 : vector<1x128xf32> to vector<16x128xf32>
    %14 = arith.addf %11, %13 : vector<16x128xf32>
    %cst_11 = arith.constant 0.000000e+00 : f32
    %15 = vector.broadcast %cst_11 : f32 to vector<16x128xf32>
    %16 = arith.maximumf %14, %15 : vector<16x128xf32>
    %17 = arith.truncf %16 : vector<16x128xf32> to vector<16x128xbf16>
    %c0_12 = arith.constant 0 : index
    %c0_13 = arith.constant 0 : index
    %18 = vector.load %arg6[%c0_12, %c0_13] : memref<128x14xbf16, #tpu.memory_space<vmem>>, vector<128x14xbf16>
    %cst_14 = arith.constant dense<0.000000e+00> : vector<16x14xf32>
    %19 = tpu.matmul %17, %18, %cst_14 {dimension_numbers = #tpu.dot_dimension_numbers<[1], [0], [0], [1], [0, 0, 1, 1], [], []>} : vector<16x128xbf16>, vector<128x14xbf16>, vector<16x14xf32> -> vector<16x14xf32>
    %c0_15 = arith.constant 0 : index
    %c0_16 = arith.constant 0 : index
    %20 = vector.load %arg7[%c0_15, %c0_16] : memref<1x14xf32, #tpu.memory_space<vmem>>, vector<1x14xf32>
    %21 = vector.broadcast %20 : vector<1x14xf32> to vector<16x14xf32>
    %22 = arith.addf %19, %21 : vector<16x14xf32>
    %c0_17 = arith.constant 0 : index
    %c0_18 = arith.constant 0 : index
    %23 = vector.load %arg8[%c0_17, %c0_18] : memref<16x14xf32, #tpu.memory_space<vmem>>, vector<16x14xf32>
    tpu.vector_store %arg8[%c0_17, %c0_18], %22 {strides = array<i32>} : memref<16x14xf32, #tpu.memory_space<vmem>>, vector<16x14xf32>,
    return
  }
  func.func @transform_0(%arg0: i32) -> (i32, i32) {
    %c0_i32 = arith.constant 0 : i32
    %c0_i32_0 = arith.constant 0 : i32
    return %arg0, %c0_i32 : i32, i32
  }
  func.func @transform_1(%arg0: i32) -> (i32, i32) {
    %c0_i32 = arith.constant 0 : i32
    %c0_i32_0 = arith.constant 0 : i32
    %c0_i32_1 = arith.constant 0 : i32
    return %c0_i32, %c0_i32_0 : i32, i32
  }
  func.func @transform_2(%arg0: i32) -> (i32, i32) {
    %c0_i32 = arith.constant 0 : i32
    %c0_i32_0 = arith.constant 0 : i32
    %c0_i32_1 = arith.constant 0 : i32
    return %c0_i32, %c0_i32_0 : i32, i32
  }
  func.func @transform_3(%arg0: i32) -> (i32, i32) {
    %c0_i32 = arith.constant 0 : i32
    %c0_i32_0 = arith.constant 0 : i32
    %c0_i32_1 = arith.constant 0 : i32
    return %c0_i32, %c0_i32_0 : i32, i32
  }
  func.func @transform_4(%arg0: i32) -> (i32, i32) {
    %c0_i32 = arith.constant 0 : i32
    %c0_i32_0 = arith.constant 0 : i32
    %c0_i32_1 = arith.constant 0 : i32
    return %c0_i32, %c0_i32_0 : i32, i32
  }
  func.func @transform_5(%arg0: i32) -> (i32, i32) {
    %c0_i32 = arith.constant 0 : i32
    %c0_i32_0 = arith.constant 0 : i32
    %c0_i32_1 = arith.constant 0 : i32
    return %c0_i32, %c0_i32_0 : i32, i32
  }
  func.func @transform_6(%arg0: i32) -> (i32, i32) {
    %c0_i32 = arith.constant 0 : i32
    %c0_i32_0 = arith.constant 0 : i32
    %c0_i32_1 = arith.constant 0 : i32
    return %c0_i32, %c0_i32_0 : i32, i32
  }
  func.func @transform_7(%arg0: i32) -> (i32, i32) {
    %c0_i32 = arith.constant 0 : i32
    %c0_i32_0 = arith.constant 0 : i32
    return %arg0, %c0_i32 : i32, i32
  }
}

</mosaic_0001>

<llo_original>
// kernel: dqn_forward.1
$region0: #{dqn_forward.1}
  #allocation0 [shape = 'u32[]', space=smem, size = 0x4, offset = 0x4, fixed_abs, tag = 'smem constant byte address 0x4 - core index']
  #allocation1 [shape = 'u32[144,128]{1,0:T(1,128)}', space=vmem, size = 0x12000, scoped, tag = 'internal scratch']
  %s0 = inlined_call_operand.vmem [shape: f32[16,29], index: 0, kind: input, shape index: {}]
  %s1 = inlined_call_operand.vmem [shape: bf16[29,128], index: 1, kind: input, shape index: {}]
  %s2 = inlined_call_operand.vmem [shape: f32[1,128], index: 2, kind: input, shape index: {}]
  %s3 = inlined_call_operand.vmem [shape: bf16[128,128], index: 3, kind: input, shape index: {}]
  %s4 = inlined_call_operand.vmem [shape: f32[1,128], index: 4, kind: input, shape index: {}]
  %s5 = inlined_call_operand.vmem [shape: bf16[128,14], index: 5, kind: input, shape index: {}]
  %s6 = inlined_call_operand.vmem [shape: f32[1,14], index: 6, kind: input, shape index: {}]
  %s7 = inlined_call_operand.vmem [shape: f32[16,14], index: 7, kind: output, shape index: {}]
  %s8 = sld [smem:[#allocation0]]
  $region38: #{dqn_forward.1} parent=0
    _
  %s10 = ssub.s32 1, %s8
  %s11 = scalar_select 0, %s10, %s8
  // Predicated region
  $region2: #{dqn_forward.1} parent=0 // pred_check
    _
  $region3: #{dqn_forward.1} parent=0 // pred_check_branch
    %13 = sbr.rel (0) target = $region5
  $region4: #{dqn_forward.1} parent=0 // pred_region
    _
  $region5: #{dqn_forward.1} parent=0 // pred_fallthru
    _
  // Predicated region
  $region6: #{dqn_forward.1} parent=0 // pred_check
    _
  $region7: #{dqn_forward.1} parent=0 // pred_check_branch
    %15 = sbr.rel (0) target = $region9
  $region8: #{dqn_forward.1} parent=0 // pred_region
    _
  $region9: #{dqn_forward.1} parent=0 // pred_fallthru
    _
  // Predicated region
  $region10: #{dqn_forward.1} parent=0 // pred_check
    _
  $region11: #{dqn_forward.1} parent=0 // pred_check_branch
    %17 = sbr.rel (0) target = $region13
  $region12: #{dqn_forward.1} parent=0 // pred_region
    _
  $region13: #{dqn_forward.1} parent=0 // pred_fallthru
    _
  // Predicated region
  $region14: #{dqn_forward.1} parent=0 // pred_check
    _
  $region15: #{dqn_forward.1} parent=0 // pred_check_branch
    %19 = sbr.rel (0) target = $region17
  $region16: #{dqn_forward.1} parent=0 // pred_region
    _
  $region17: #{dqn_forward.1} parent=0 // pred_fallthru
    _
  // Predicated region
  $region18: #{dqn_forward.1} parent=0 // pred_check
    _
  $region19: #{dqn_forward.1} parent=0 // pred_check_branch
    %21 = sbr.rel (0) target = $region21
  $region20: #{dqn_forward.1} parent=0 // pred_region
    _
  $region21: #{dqn_forward.1} parent=0 // pred_fallthru
    _
  // Predicated region
  $region22: #{dqn_forward.1} parent=0 // pred_check
    _
  $region23: #{dqn_forward.1} parent=0 // pred_check_branch
    %23 = sbr.rel (0) target = $region25
  $region24: #{dqn_forward.1} parent=0 // pred_region
    _
  $region25: #{dqn_forward.1} parent=0 // pred_fallthru
    _
  // Predicated region
  $region26: #{dqn_forward.1} parent=0 // pred_check
    _
  $region27: #{dqn_forward.1} parent=0 // pred_check_branch
    %25 = sbr.rel (0) target = $region29
  $region28: #{dqn_forward.1} parent=0 // pred_region
    _
  $region29: #{dqn_forward.1} parent=0 // pred_fallthru
    _
  %v27 = vld [vmem:[%s0] sm:$0xff]
  %v28 = vld [vmem:[%s0 + $0x8] sm:$0xff]
  %v29 = vpack.c.bf16 %v28, %v27
  %v30 = vld [vmem:[%s1] sm:$0xf]
  %v31 = vld [vmem:[%s1 + $0x4] sm:$0xf]
  %v32 = vld [vmem:[%s1 + $0x8] sm:$0xf]
  %v33 = vld [vmem:[%s1 + $0xc] sm:$0x7]
  %v34 = vld [vmem:[%s2] sm:$0x1]
  %v36 = vlaneseq
  %v37 = vshrl.u32 %v36, 7
  %v38 = vsub.s32 0, %v37
  %v39 = vrot.slane %v34, %v38
  %v45 = vunpack.c.l.b16 %v30
  %v46 = vunpack.c.l.b16 %v31
  %v47 = vunpack.c.l.b16 %v32
  %v48 = vunpack.c.l.b16 %v33
  %v49 = vpack.c.b16 %v46, %v45
  %v50 = vpack.c.b16 %v48, %v47
  %vm52 = vcmask 236544
  %v54 = vsel %vm52, %v29, 0
  %vm56 = vcmask 1045504
  %vm57 = vcmask 1046528
  %v58 = vsel %vm56, 4294967295, 65535
  %v59 = vsel %vm57, %v58, 0
  %v61 = vand.u32 %v50, %v59
  %63 = vmatprep.subr.bf16.mxu0 0
  %64 = vmatpush1.bf16.msra.mxu0 0
  %65 = vmatprep.subr.bf16.mxu0 0
  %66 = vmatpush1.bf16.msra.mxu0 0
  %67 = vmatprep.subr.bf16.mxu0 0
  %68 = vmatpush1.bf16.msra.mxu0 0
  %69 = vmatprep.subr.bf16.mxu0 0
  %70 = vmatpush1.bf16.msra.mxu0 0
  %71 = vmatprep.subr.bf16.mxu0 0
  %72 = vmatpush1.bf16.msra.mxu0 0
  %73 = vmatprep.subr.bf16.mxu0 0
  %74 = vmatpush1.bf16.msra.mxu0 0
  %75 = vmatprep.subr.bf16.mxu0 0
  %76 = vmatpush1.bf16.msra.mxu0 %v61
  %77 = vmatprep.subr.bf16.mxu0 0
  %78 = vmatpush1.bf16.msra.mxu0 %v49
  %79 = vmatprep.subr.bf16.mxu0 0
  %80 = vmatpush2.bf16.msra.mxu0 0
  %81 = vmatprep.subr.bf16.mxu0 0
  %82 = vmatpush2.bf16.msra.mxu0 0
  %83 = vmatprep.subr.bf16.mxu0 0
  %84 = vmatpush2.bf16.msra.mxu0 0
  %85 = vmatprep.subr.bf16.mxu0 0
  %86 = vmatpush2.bf16.msra.mxu0 0
  %87 = vmatprep.subr.bf16.mxu0 0
  %88 = vmatpush2.bf16.msra.mxu0 0
  %89 = vmatprep.subr.bf16.mxu0 0
  %90 = vmatpush2.bf16.msra.mxu0 0
  %91 = vmatprep.subr.bf16.mxu0 0
  %92 = vmatpush2.bf16.msra.mxu0 0
  %93 = vmatprep.subr.bf16.mxu0 0
  %94 = vmatpush2.bf16.msra.mxu0 0
  %95 = vmatprep.mubr.bf16.mxu0 0
  %96 = vmatmul.mubr.bf16.gmra.mxu0 %v54
  %v97 = vpop.f32.mrf.mxu0
  %v98 = vadd.f32 %v39, %v97
  %v99 = vpop.f32.mrf.mxu0
  %v100 = vpop.f32.mrf.mxu0
  %v101 = vadd.f32 %v39, %v100
  %v102 = vpop.f32.mrf.mxu0
  %103 = vdwg.mxu0
  %v104 = vmax.f32 %v98, 0.0
  %v105 = vmax.f32 %v101, 0.0
  %v106 = vpack.c.bf16 %v105, %v104
  %v107 = vld [vmem:[%s3] sm:$0xf]
  %v108 = vld [vmem:[%s3 + $0x4] sm:$0xf]
  %v109 = vld [vmem:[%s3 + $0x8] sm:$0xf]
  %v110 = vld [vmem:[%s3 + $0xc] sm:$0xf]
  %v111 = vld [vmem:[%s3 + $0x10] sm:$0xf]
  %v112 = vld [vmem:[%s3 + $0x14] sm:$0xf]
  %v113 = vld [vmem:[%s3 + $0x18] sm:$0xf]
  %v114 = vld [vmem:[%s3 + $0x1c] sm:$0xf]
  %v115 = vld [vmem:[%s3 + $0x20] sm:$0xf]
  %v116 = vld [vmem:[%s3 + $0x24] sm:$0xf]
  %v117 = vld [vmem:[%s3 + $0x28] sm:$0xf]
  %v118 = vld [vmem:[%s3 + $0x2c] sm:$0xf]
  %v119 = vld [vmem:[%s3 + $0x30] sm:$0xf]
  %v120 = vld [vmem:[%s3 + $0x34] sm:$0xf]
  %v121 = vld [vmem:[%s3 + $0x38] sm:$0xf]
  %v122 = vld [vmem:[%s3 + $0x3c] sm:$0xf]
  %v123 = vld [vmem:[%s4] sm:$0x1]
  %v125 = vlaneseq
  %v126 = vshrl.u32 %v125, 7
  %v127 = vsub.s32 0, %v126
  %v128 = vrot.slane %v123, %v127
  %v146 = vunpack.c.l.b16 %v107
  %v147 = vunpack.c.l.b16 %v108
  %v148 = vunpack.c.l.b16 %v109
  %v149 = vunpack.c.l.b16 %v110
  %v150 = vunpack.c.l.b16 %v111
  %v151 = vunpack.c.l.b16 %v112
  %v152 = vunpack.c.l.b16 %v113
  %v153 = vunpack.c.l.b16 %v114
  %v154 = vunpack.c.l.b16 %v115
  %v155 = vunpack.c.l.b16 %v116
  %v156 = vunpack.c.l.b16 %v117
  %v157 = vunpack.c.l.b16 %v118
  %v158 = vunpack.c.l.b16 %v119
  %v159 = vunpack.c.l.b16 %v120
  %v160 = vunpack.c.l.b16 %v121
  %v161 = vunpack.c.l.b16 %v122
  %v162 = vpack.c.b16 %v147, %v146
  %v163 = vpack.c.b16 %v149, %v148
  %v164 = vpack.c.b16 %v151, %v150
  %v165 = vpack.c.b16 %v153, %v152
  %v166 = vpack.c.b16 %v155, %v154
  %v167 = vpack.c.b16 %v157, %v156
  %v168 = vpack.c.b16 %v159, %v158
  %v169 = vpack.c.b16 %v161, %v160
  %178 = vmatprep.subr.bf16.mxu0 0
  %179 = vmatpush1.bf16.msra.mxu0 %v169
  %180 = vmatprep.subr.bf16.mxu0 0
  %181 = vmatpush1.bf16.msra.mxu0 %v168
  %182 = vmatprep.subr.bf16.mxu0 0
  %183 = vmatpush1.bf16.msra.mxu0 %v167
  %184 = vmatprep.subr.bf16.mxu0 0
  %185 = vmatpush1.bf16.msra.mxu0 %v166
  %186 = vmatprep.subr.bf16.mxu0 0
  %187 = vmatpush1.bf16.msra.mxu0 %v165
  %188 = vmatprep.subr.bf16.mxu0 0
  %189 = vmatpush1.bf16.msra.mxu0 %v164
  %190 = vmatprep.subr.bf16.mxu0 0
  %191 = vmatpush1.bf16.msra.mxu0 %v163
  %192 = vmatprep.subr.bf16.mxu0 0
  %193 = vmatpush1.bf16.msra.mxu0 %v162
  %194 = vmatprep.subr.bf16.mxu0 0
  %195 = vmatpush2.bf16.msra.mxu0 0
  %196 = vmatprep.subr.bf16.mxu0 0
  %197 = vmatpush2.bf16.msra.mxu0 0
  %198 = vmatprep.subr.bf16.mxu0 0
  %199 = vmatpush2.bf16.msra.mxu0 0
  %200 = vmatprep.subr.bf16.mxu0 0
  %201 = vmatpush2.bf16.msra.mxu0 0
  %202 = vmatprep.subr.bf16.mxu0 0
  %203 = vmatpush2.bf16.msra.mxu0 0
  %204 = vmatprep.subr.bf16.mxu0 0
  %205 = vmatpush2.bf16.msra.mxu0 0
  %206 = vmatprep.subr.bf16.mxu0 0
  %207 = vmatpush2.bf16.msra.mxu0 0
  %208 = vmatprep.subr.bf16.mxu0 0
  %209 = vmatpush2.bf16.msra.mxu0 0
  %210 = vmatprep.mubr.bf16.mxu0 0
  %211 = vmatmul.mubr.bf16.gmra.mxu0 %v106
  %v212 = vpop.f32.mrf.mxu0
  %v213 = vadd.f32 %v128, %v212
  %v214 = vpop.f32.mrf.mxu0
  %v215 = vpop.f32.mrf.mxu0
  %v216 = vadd.f32 %v128, %v215
  %v217 = vpop.f32.mrf.mxu0
  %218 = vdwg.mxu0
  %v219 = vmax.f32 %v213, 0.0
  %v220 = vmax.f32 %v216, 0.0
  %v221 = vpack.c.bf16 %v220, %v219
  %v222 = vld [vmem:[%s5] sm:$0xf]
  %v223 = vld [vmem:[%s5 + $0x4] sm:$0xf]
  %v224 = vld [vmem:[%s5 + $0x8] sm:$0xf]
  %v225 = vld [vmem:[%s5 + $0xc] sm:$0xf]
  %v226 = vld [vmem:[%s5 + $0x10] sm:$0xf]
  %v227 = vld [vmem:[%s5 + $0x14] sm:$0xf]
  %v228 = vld [vmem:[%s5 + $0x18] sm:$0xf]
  %v229 = vld [vmem:[%s5 + $0x1c] sm:$0xf]
  %v230 = vld [vmem:[%s5 + $0x20] sm:$0xf]
  %v231 = vld [vmem:[%s5 + $0x24] sm:$0xf]
  %v232 = vld [vmem:[%s5 + $0x28] sm:$0xf]
  %v233 = vld [vmem:[%s5 + $0x2c] sm:$0xf]
  %v234 = vld [vmem:[%s5 + $0x30] sm:$0xf]
  %v235 = vld [vmem:[%s5 + $0x34] sm:$0xf]
  %v236 = vld [vmem:[%s5 + $0x38] sm:$0xf]
  %v237 = vld [vmem:[%s5 + $0x3c] sm:$0xf]
  %v238 = vld [vmem:[%s6] sm:$0x1]
  %v240 = vlaneseq
  %v241 = vshrl.u32 %v240, 7
  %v242 = vsub.s32 0, %v241
  %v243 = vrot.slane %v238, %v242
  %v261 = vunpack.c.l.b16 %v222
  %v262 = vunpack.c.l.b16 %v223
  %v263 = vunpack.c.l.b16 %v224
  %v264 = vunpack.c.l.b16 %v225
  %v265 = vunpack.c.l.b16 %v226
  %v266 = vunpack.c.l.b16 %v227
  %v267 = vunpack.c.l.b16 %v228
  %v268 = vunpack.c.l.b16 %v229
  %v269 = vunpack.c.l.b16 %v230
  %v270 = vunpack.c.l.b16 %v231
  %v271 = vunpack.c.l.b16 %v232
  %v272 = vunpack.c.l.b16 %v233
  %v273 = vunpack.c.l.b16 %v234
  %v274 = vunpack.c.l.b16 %v235
  %v275 = vunpack.c.l.b16 %v236
  %v276 = vunpack.c.l.b16 %v237
  %v277 = vpack.c.b16 %v262, %v261
  %v278 = vpack.c.b16 %v264, %v263
  %v279 = vpack.c.b16 %v266, %v265
  %v280 = vpack.c.b16 %v268, %v267
  %v281 = vpack.c.b16 %v270, %v269
  %v282 = vpack.c.b16 %v272, %v271
  %v283 = vpack.c.b16 %v274, %v273
  %v284 = vpack.c.b16 %v276, %v275
  %293 = vmatprep.subr.bf16.mxu0 0
  %294 = vmatpush1.bf16.msra.mxu0 %v284
  %295 = vmatprep.subr.bf16.mxu0 0
  %296 = vmatpush1.bf16.msra.mxu0 %v283
  %297 = vmatprep.subr.bf16.mxu0 0
  %298 = vmatpush1.bf16.msra.mxu0 %v282
  %299 = vmatprep.subr.bf16.mxu0 0
  %300 = vmatpush1.bf16.msra.mxu0 %v281
  %301 = vmatprep.subr.bf16.mxu0 0
  %302 = vmatpush1.bf16.msra.mxu0 %v280
  %303 = vmatprep.subr.bf16.mxu0 0
  %304 = vmatpush1.bf16.msra.mxu0 %v279
  %305 = vmatprep.subr.bf16.mxu0 0
  %306 = vmatpush1.bf16.msra.mxu0 %v278
  %307 = vmatprep.subr.bf16.mxu0 0
  %308 = vmatpush1.bf16.msra.mxu0 %v277
  %309 = vmatprep.subr.bf16.mxu0 0
  %310 = vmatpush2.bf16.msra.mxu0 0
  %311 = vmatprep.subr.bf16.mxu0 0
  %312 = vmatpush2.bf16.msra.mxu0 0
  %313 = vmatprep.subr.bf16.mxu0 0
  %314 = vmatpush2.bf16.msra.mxu0 0
  %315 = vmatprep.subr.bf16.mxu0 0
  %316 = vmatpush2.bf16.msra.mxu0 0
  %317 = vmatprep.subr.bf16.mxu0 0
  %318 = vmatpush2.bf16.msra.mxu0 0
  %319 = vmatprep.subr.bf16.mxu0 0
  %320 = vmatpush2.bf16.msra.mxu0 0
  %321 = vmatprep.subr.bf16.mxu0 0
  %322 = vmatpush2.bf16.msra.mxu0 0
  %323 = vmatprep.subr.bf16.mxu0 0
  %324 = vmatpush2.bf16.msra.mxu0 0
  %325 = vmatprep.mubr.bf16.mxu0 0
  %326 = vmatmul.mubr.bf16.gmra.mxu0 %v221
  %v327 = vpop.f32.mrf.mxu0
  %v328 = vadd.f32 %v243, %v327
  %v329 = vpop.f32.mrf.mxu0
  %v330 = vpop.f32.mrf.mxu0
  %v331 = vadd.f32 %v243, %v330
  %v332 = vpop.f32.mrf.mxu0
  %333 = vdwg.mxu0
  %vm334 = vcmask 113664
  %335 = vst.msk [vmem:[%s7] sm:$0xff] %vm334, %v328
  %336 = vst.msk [vmem:[%s7 + $0x8] sm:$0xff] %vm334, %v331
  // Predicated region
  $region30: #{dqn_forward.1} parent=0 // pred_check
    _
  $region31: #{dqn_forward.1} parent=0 // pred_check_branch
    %338 = sbr.rel (0) target = $region33
  $region32: #{dqn_forward.1} parent=0 // pred_region
    _
  $region33: #{dqn_forward.1} parent=0 // pred_fallthru
    _
  // Predicated region
  $region34: #{dqn_forward.1} parent=0 // pred_check
    _
  $region35: #{dqn_forward.1} parent=0 // pred_check_branch
    %340 = sbr.rel (0) target = $region37
  $region36: #{dqn_forward.1} parent=0 // pred_region
    _
  $region37: #{dqn_forward.1} parent=0 // pred_fallthru
    _

</llo_original>
